<compile_context>
chip_gen: v6e
topology: v6e:2x2x1
jax: 0.10.0
libtpu: 0.0.40
codegen_flags: <defaults>
</compile_context>

<pallas_src>
import functools

import numpy as np
import jax
import jax.numpy as jnp
from jax.experimental import pallas as pl
from jax.experimental.pallas import tpu as pltpu


_DEFAULT_ALPHAS = (0.125, 0.25, 0.5, 1.0, 2.0)   # standard DAN Gaussian bank
_EPS = 1e-12


# ---------------------------------------------------------------------------
# Shared in-kernel helpers
# ---------------------------------------------------------------------------
def _multi_kernel_sum(dist, mean_dist, alphas):
    """sum_u exp(-dist / (2 * alpha_u * mean_dist)).

    When the alpha bank is a power-of-two chain (the DAN default), uses a single
    EUP exp plus repeated squaring on the 4-wide VALU:
        base = exp(-dist / (2 * a_max * mean));   k_u = base ** (a_max / a_u)
    Falls back to one exp per alpha otherwise.
    """
    alphas = tuple(float(a) for a in alphas)
    a_sorted = sorted(alphas, reverse=True)
    a_max = a_sorted[0]
    ratios = [a_max / a for a in a_sorted]

    def _is_pow2_int(r):
        ri = int(round(r))
        return ri >= 1 and abs(r - ri) < 1e-9 and (ri & (ri - 1)) == 0

    if all(_is_pow2_int(r) for r in ratios):
        c0 = -0.5 / jnp.maximum(a_max * mean_dist, _EPS)    # scalar coefficient
        cur = jnp.exp(dist * c0)                            # the only EUP push
        acc = cur
        cur_pow = 1
        for r in ratios[1:]:
            ri = int(round(r))
            while cur_pow < ri:                             # VALU squarings
                cur = cur * cur
                cur_pow *= 2
            acc = acc + cur
        return acc

    acc = None                                              # generic fallback
    for a in alphas:
        c = -0.5 / jnp.maximum(a * mean_dist, _EPS)
        term = jnp.exp(dist * c)
        acc = term if acc is None else acc + term
    return acc


def _gram(a, b):
    # Contract both operands on the lane (feature) axis -> MXU, no explicit
    # transpose in the kernel body (same contraction pattern as flash-attn QK^T).
    return jax.lax.dot_general(
        a, b, dimension_numbers=(((1,), (1,)), ((), ())),
        preferred_element_type=jnp.float32)


# ---------------------------------------------------------------------------
# Kernels
# ---------------------------------------------------------------------------
def _mkmmd_dense_kernel(zs_ref, zt_ref, o_ref, *, alphas, batch_size, bf16_gram):
    """Untiled single-pass kernel (non-linear DAN), blockwise SS/TT/ST."""
    B = batch_size
    n = 2 * B
    m = float(len(alphas))

    s = zs_ref[...].astype(jnp.float32)                     # (B, D)
    t = zt_ref[...].astype(jnp.float32)                     # (B, D)

    sq_s = jnp.sum(s * s, axis=-1, keepdims=True)           # (B, 1), f32
    sq_t = jnp.sum(t * t, axis=-1, keepdims=True)

    # Closed-form mean pairwise squared distance over the full (2B, 2B) matrix:
    #   sum_ij dist = 2N * sum_i ||x_i||^2 - 2 * ||sum_i x_i||^2
    colsum = jnp.sum(s, axis=0, keepdims=True) + jnp.sum(t, axis=0, keepdims=True)
    sum_sq = jnp.sum(sq_s) + jnp.sum(sq_t)
    mean_dist = (2.0 * float(n) * sum_sq
                 - 2.0 * jnp.sum(colsum * colsum)) / float(n * n)

    if bf16_gram:   # optional: native bf16 MXU (4-8x matmul throughput)
        gs, gt = s.astype(jnp.bfloat16), t.astype(jnp.bfloat16)
    else:
        gs, gt = s, t

    d_ss = jnp.maximum(sq_s + sq_s.T - 2.0 * _gram(gs, gs), 0.0)
    d_tt = jnp.maximum(sq_t + sq_t.T - 2.0 * _gram(gt, gt), 0.0)
    d_st = jnp.maximum(sq_s + sq_t.T - 2.0 * _gram(gs, gt), 0.0)

    k_ss = _multi_kernel_sum(d_ss, mean_dist, alphas)
    k_tt = _multi_kernel_sum(d_tt, mean_dist, alphas)
    k_st = _multi_kernel_sum(d_st, mean_dist, alphas)       # shared by ST and TS

    # No (2B,2B) index matrix: same-domain weight is 1/(B(B-1)) off-diagonal
    # (diag of K is len(alphas) since dist_ii == 0), cross-domain -1/B^2, and
    # the TS block equals the ST block by symmetry.
    sum_same = jnp.sum(k_ss) + jnp.sum(k_tt) - 2.0 * float(B) * m
    sum_cross = 2.0 * jnp.sum(k_st)
    loss = (sum_same / float(B * (B - 1))
            - sum_cross / float(B * B)
            + 2.0 / float(B - 1))
    o_ref[0, 0] = loss


def _mkmmd_linear_kernel(zs_ref, zt_ref, zsn_ref, ztn_ref, o_ref, *,
                         alphas, batch_size):
    """Linear-DAN variant: only 4B kernel entries are referenced -> O(B*D)."""
    B = batch_size
    n = 2 * B
    s = zs_ref[...].astype(jnp.float32)
    t = zt_ref[...].astype(jnp.float32)
    sn = zsn_ref[...].astype(jnp.float32)                   # z_s[(i+1) % B]
    tn = ztn_ref[...].astype(jnp.float32)                   # z_t[(i+1) % B]

    sq_s = jnp.sum(s * s, axis=-1, keepdims=True)
    sq_t = jnp.sum(t * t, axis=-1, keepdims=True)
    colsum = jnp.sum(s, axis=0, keepdims=True) + jnp.sum(t, axis=0, keepdims=True)
    mean_dist = (2.0 * float(n) * (jnp.sum(sq_s) + jnp.sum(sq_t))
                 - 2.0 * jnp.sum(colsum * colsum)) / float(n * n)

    d_ss = jnp.sum((s - sn) ** 2, axis=-1, keepdims=True)   # k(s_i, s_{i+1})
    d_tt = jnp.sum((t - tn) ** 2, axis=-1, keepdims=True)   # k(t_i, t_{i+1})
    d_st = jnp.sum((s - tn) ** 2, axis=-1, keepdims=True)   # k(s_i, t_{i+1})
    d_ts = jnp.sum((sn - t) ** 2, axis=-1, keepdims=True)   # k(s_{i+1}, t_i)

    km = (_multi_kernel_sum(d_ss, mean_dist, alphas)
          + _multi_kernel_sum(d_tt, mean_dist, alphas)
          - _multi_kernel_sum(d_st, mean_dist, alphas)
          - _multi_kernel_sum(d_ts, mean_dist, alphas))
    o_ref[0, 0] = jnp.sum(km) / float(B) + 2.0 / float(B - 1)


def _mkmmd_tiled_kernel(bi_ref, bj_ref, xr_ref, xc_ref, mean_ref, o_ref, acc_ref,
                        *, alphas, batch_size, n_valid, tile, bf16_gram):
    """Tiled (large-batch) kernel over upper-triangular tile pairs."""
    B = batch_size
    t = pl.program_id(0)

    @pl.when(t == 0)
    def _():
        acc_ref[0, 0] = jnp.float32(0.0)

    bi = bi_ref[t]                                          # block row index
    bj = bj_ref[t]                                          # block col index

    xr = xr_ref[...].astype(jnp.float32)                    # (tile, D)
    xc = xc_ref[...].astype(jnp.float32)                    # (tile, D)
    sq_r = jnp.sum(xr * xr, axis=-1, keepdims=True)
    sq_c = jnp.sum(xc * xc, axis=-1, keepdims=True)
    if bf16_gram:
        gr, gc = xr.astype(jnp.bfloat16), xc.astype(jnp.bfloat16)
    else:
        gr, gc = xr, xc
    dist = jnp.maximum(sq_r + sq_c.T - 2.0 * _gram(gr, gc), 0.0)
    km = _multi_kernel_sum(dist, mean_ref[0, 0], alphas)

    # Per-element weights from global indices (diagonal excluded, padded
    # rows/cols masked). Upper-triangular tiles are visited once and doubled.
    rg = bi * tile + jax.lax.broadcasted_iota(jnp.int32, (tile, tile), 0)
    cg = bj * tile + jax.lax.broadcasted_iota(jnp.int32, (tile, tile), 1)
    cross = jnp.logical_xor(rg < B, cg < B)
    w = jnp.where(cross, -1.0 / float(B * B), 1.0 / float(B * (B - 1)))
    invalid = (rg == cg) | (rg >= n_valid) | (cg >= n_valid)
    w = jnp.where(invalid, 0.0, w)
    scale = jnp.where(bi == bj, 1.0, 2.0)                   # symmetry doubling
    acc_ref[0, 0] += scale * jnp.sum(km * w)

    @pl.when(t == pl.num_programs(0) - 1)
    def _():
        o_ref[0, 0] = acc_ref[0, 0] + 2.0 / float(B - 1)


# ---------------------------------------------------------------------------
# Wrapper
# ---------------------------------------------------------------------------
def _physical_vmem_bytes():
    try:
        return int(pltpu.get_tpu_info().vmem_capacity_bytes)
    except Exception:
        return 64 * 1024 * 1024          # v7x per-TC floor (most conservative)


@functools.partial(
    jax.jit,
    static_argnames=("alphas", "linear", "bf16_gram", "block_size", "force_tiled"))
def mkmmd_loss(z_s, z_t, alphas=_DEFAULT_ALPHAS, linear=False, bf16_gram=False,
               block_size=256, force_tiled=False):
    """JAX/Pallas forward of MultipleKernelMaximumMeanDiscrepancy (DAN MK-MMD)."""
    assert z_s.shape == z_t.shape, "z_s and z_t must have the same shape"
    z_s = z_s.reshape((z_s.shape[0], -1))
    z_t = z_t.reshape((z_t.shape[0], -1))
    B, D = int(z_s.shape[0]), int(z_s.shape[1])
    assert B >= 2, "MK-MMD requires batch_size >= 2 (2/(B-1) term)"
    n = 2 * B
    alphas = tuple(float(a) for a in alphas)

    phys_vmem = _physical_vmem_bytes()
    vmem_cap = int(phys_vmem * 0.8)      # leave headroom for Mosaic scratch / buffers

    if linear:
        # NOTE: matches the PyTorch assignment semantics for B >= 3 (B == 2
        # collides index-matrix entries in the reference implementation).
        zs_next = jnp.roll(z_s, shift=-1, axis=0)
        zt_next = jnp.roll(z_t, shift=-1, axis=0)
        est = int(1.5 * 8 * B * D * 4) + (1 << 20)
        out = pl.pallas_call(
            functools.partial(_mkmmd_linear_kernel, alphas=alphas, batch_size=B),
            out_shape=jax.ShapeDtypeStruct((1, 1), jnp.float32),
            in_specs=[pl.BlockSpec((B, D), lambda: (0, 0)) for _ in range(4)],
            out_specs=pl.BlockSpec(memory_space=pltpu.MemorySpace.SMEM),
            compiler_params=pltpu.CompilerParams(
                vmem_limit_bytes=min(vmem_cap, max(32 * 1024 * 1024, est))),
        )(z_s, z_t, zs_next, zt_next)
        return out[0, 0]

    # Non-linear (default) path. Working set of the untiled blockwise kernel:
    # three (B,B) gram/dist/K pipelines + the two (B,D) inputs, inflated 1.5x
    # for select/cast temporaries.
    est_untiled = int(1.5 * (12 * B * B + 6 * B * D) * 4) + (1 << 20)

    if not force_tiled and est_untiled <= vmem_cap:
        out = pl.pallas_call(
            functools.partial(_mkmmd_dense_kernel, alphas=alphas, batch_size=B,
                              bf16_gram=bool(bf16_gram)),
            out_shape=jax.ShapeDtypeStruct((1, 1), jnp.float32),
            in_specs=[pl.BlockSpec((B, D), lambda: (0, 0)),
                      pl.BlockSpec((B, D), lambda: (0, 0))],
            out_specs=pl.BlockSpec(memory_space=pltpu.MemorySpace.SMEM),
            compiler_params=pltpu.CompilerParams(
                vmem_limit_bytes=min(vmem_cap, max(32 * 1024 * 1024, est_untiled))),
        )(z_s, z_t)
        return out[0, 0]

    # ---- Tiled path for large batches ----
    tile = int(block_size)
    assert tile % 8 == 0, "block_size must be a multiple of 8 (sublane tiling)"

    feats = jnp.concatenate([z_s, z_t], axis=0).astype(jnp.float32)     # (2B, D)
    # Closed-form mean pairwise squared distance, O(N*D) in plain XLA.
    sq = jnp.sum(feats * feats, axis=-1)
    colsum = jnp.sum(feats, axis=0)
    mean_dist = ((2.0 * float(n) * jnp.sum(sq) - 2.0 * jnp.sum(colsum * colsum))
                 / float(n * n))
    mean_arr = mean_dist.reshape(1, 1).astype(jnp.float32)

    nblk = pl.cdiv(n, tile)
    n_pad = nblk * tile
    if n_pad != n:
        feats = jnp.pad(feats, ((0, n_pad - n), (0, 0)))

    bi_np, bj_np = np.triu_indices(nblk)                    # upper-triangular tiles
    bi = jnp.asarray(bi_np, dtype=jnp.int32)
    bj = jnp.asarray(bj_np, dtype=jnp.int32)
    num_tiles = int(bi_np.shape[0])

    est_tile = int(1.5 * (2 * 2 * tile * D * 4 + 8 * tile * tile * 4)) + (1 << 20)
    out = pl.pallas_call(
        functools.partial(_mkmmd_tiled_kernel, alphas=alphas, batch_size=B,
                          n_valid=n, tile=tile, bf16_gram=bool(bf16_gram)),
        out_shape=jax.ShapeDtypeStruct((1, 1), jnp.float32),
        grid_spec=pltpu.PrefetchScalarGridSpec(
            num_scalar_prefetch=2,
            grid=(num_tiles,),
            in_specs=[
                pl.BlockSpec((tile, D), lambda t, bi_r, bj_r: (bi_r[t], 0)),  # rows
                pl.BlockSpec((tile, D), lambda t, bi_r, bj_r: (bj_r[t], 0)),  # cols
                pl.BlockSpec(memory_space=pltpu.MemorySpace.SMEM),            # mean
            ],
            out_specs=pl.BlockSpec(memory_space=pltpu.MemorySpace.SMEM),
            scratch_shapes=[pltpu.SMEM((1, 1), jnp.float32)],
        ),
        compiler_params=pltpu.CompilerParams(
            dimension_semantics=("arbitrary",),
            vmem_limit_bytes=min(vmem_cap, max(32 * 1024 * 1024, est_tile))),
    )(bi, bj, feats, feats, mean_arr)
    return out[0, 0]


# ---------------------------------------------------------------------------
# Pure-JAX reference (mirrors the PyTorch module) used only for sanity checks.
# ---------------------------------------------------------------------------
def _make_index_matrix_np(batch_size: int, linear: bool = False) -> np.ndarray:
    B = batch_size
    M = np.zeros((2 * B, 2 * B), dtype=np.float32)
    if linear:
        for i in range(B):
            s1, s2 = i, (i + 1) % B
            t1, t2 = s1 + B, s2 + B
            M[s1, s2] = 1.0 / B
            M[t1, t2] = 1.0 / B
            M[s1, t2] = -1.0 / B
            M[s2, t1] = -1.0 / B
    else:
        eye = np.eye(B, dtype=np.float32)
        off_diag = (1.0 - eye) / float(B * (B - 1))
        M[:B, :B] = off_diag
        M[B:, B:] = off_diag
        M[:B, B:] = -1.0 / float(B * B)
        M[B:, :B] = -1.0 / float(B * B)
    return M


def _mkmmd_reference(z_s, z_t, alphas, linear=False):
    feats = jnp.concatenate([z_s, z_t], axis=0).astype(jnp.float32)
    diff = feats[None, :, :] - feats[:, None, :]
    dist = jnp.sum(diff * diff, axis=-1)
    mean_dist = jnp.mean(dist)
    km = sum(jnp.exp(-dist / (2.0 * float(a) * mean_dist)) for a in alphas)
    B = int(z_s.shape[0])
    idx = jnp.asarray(_make_index_matrix_np(B, linear))
    return jnp.sum(km * idx) + 2.0 / float(B - 1)


if __name__ == "__main__":
    key = jax.random.PRNGKey(0)
    k1, k2, k3, k4 = jax.random.split(key, 4)
    alphas = _DEFAULT_ALPHAS

    # --- small dense (untiled) path ---
    B, D = 8, 32
    z_s = jax.random.normal(k1, (B, D), dtype=jnp.float32)
    z_t = jax.random.normal(k2, (B, D), dtype=jnp.float32)

    loss = jax.block_until_ready(mkmmd_loss(z_s, z_t, alphas=alphas, linear=False))
    ref = jax.block_until_ready(_mkmmd_reference(z_s, z_t, alphas, linear=False))
    np.testing.assert_allclose(np.asarray(loss), np.asarray(ref), rtol=1e-3, atol=1e-3)

    # --- linear-DAN variant (O(B*D) kernel) ---
    loss_lin = jax.block_until_ready(mkmmd_loss(z_s, z_t, alphas=alphas, linear=True))
    ref_lin = jax.block_until_ready(_mkmmd_reference(z_s, z_t, alphas, linear=True))
    np.testing.assert_allclose(np.asarray(loss_lin), np.asarray(ref_lin),
                               rtol=1e-3, atol=1e-3)

    # --- non-power-of-two alpha bank exercises the fallback exp path ---
    odd_alphas = (0.7, 1.3)
    loss_odd = jax.block_until_ready(mkmmd_loss(z_s, z_t, alphas=odd_alphas))
    ref_odd = jax.block_until_ready(_mkmmd_reference(z_s, z_t, odd_alphas))
    np.testing.assert_allclose(np.asarray(loss_odd), np.asarray(ref_odd),
                               rtol=1e-3, atol=1e-3)

    # --- forced tiled path: multiple tiles, padding, symmetry doubling ---
    B2, D2 = 160, 64
    z_s2 = jax.random.normal(k3, (B2, D2), dtype=jnp.float32)
    z_t2 = jax.random.normal(k4, (B2, D2), dtype=jnp.float32)
    loss_t = jax.block_until_ready(
        mkmmd_loss(z_s2, z_t2, alphas=alphas, force_tiled=True, block_size=128))
    ref_t = jax.block_until_ready(_mkmmd_reference(z_s2, z_t2, alphas))
    np.testing.assert_allclose(np.asarray(loss_t), np.asarray(ref_t),
                               rtol=1e-3, atol=1e-3)

    # --- optional bf16 Gram (looser tolerance; off by default) ---
    loss_bf16 = jax.block_until_ready(mkmmd_loss(z_s, z_t, alphas=alphas,
                                                 bf16_gram=True))
    np.testing.assert_allclose(np.asarray(loss_bf16), np.asarray(ref),
                               rtol=3e-2, atol=3e-2)

    print("KERNEL_OK")
</pallas_src>

<mosaic_0001>
module attributes {stable_mosaic.version = 11 : i64} {
  func.func @_mkmmd_dense_kernel(%arg0: memref<8x32xf32, #tpu.memory_space<vmem>>, %arg1: memref<8x32xf32, #tpu.memory_space<vmem>>, %arg2: memref<1x1xf32, #tpu.memory_space<smem>>) attributes {dimension_semantics = [], scalar_prefetch = 0 : i64, scratch_operands = 0 : i64, tpu.core_type = #tpu.core_type<tc>} {
    %c0 = arith.constant 0 : index
    %c0_0 = arith.constant 0 : index
    %0 = vector.load %arg0[%c0, %c0_0] : memref<8x32xf32, #tpu.memory_space<vmem>>, vector<8x32xf32>
    %c0_1 = arith.constant 0 : index
    %c0_2 = arith.constant 0 : index
    %1 = vector.load %arg1[%c0_1, %c0_2] : memref<8x32xf32, #tpu.memory_space<vmem>>, vector<8x32xf32>
    %2 = arith.mulf %0, %0 : vector<8x32xf32>
    %cst = arith.constant dense<0.000000e+00> : vector<8xf32>
    %3 = vector.multi_reduction <add>, %2, %cst [1] : vector<8x32xf32> to vector<8xf32>
    %4 = vector.shape_cast %3 : vector<8xf32> to vector<8x1xf32>
    %5 = arith.mulf %1, %1 : vector<8x32xf32>
    %cst_3 = arith.constant dense<0.000000e+00> : vector<8xf32>
    %6 = vector.multi_reduction <add>, %5, %cst_3 [1] : vector<8x32xf32> to vector<8xf32>
    %7 = vector.shape_cast %6 : vector<8xf32> to vector<8x1xf32>
    %cst_4 = arith.constant dense<0.000000e+00> : vector<32xf32>
    %8 = vector.multi_reduction <add>, %0, %cst_4 [0] : vector<8x32xf32> to vector<32xf32>
    %9 = vector.shape_cast %8 : vector<32xf32> to vector<1x32xf32>
    %cst_5 = arith.constant dense<0.000000e+00> : vector<32xf32>
    %10 = vector.multi_reduction <add>, %1, %cst_5 [0] : vector<8x32xf32> to vector<32xf32>
    %11 = vector.shape_cast %10 : vector<32xf32> to vector<1x32xf32>
    %12 = arith.addf %9, %11 : vector<1x32xf32>
    %13 = vector.shape_cast %4 : vector<8x1xf32> to vector<1x8x1xf32>
    %cst_6 = arith.constant dense<0.000000e+00> : vector<1xf32>
    %14 = vector.multi_reduction <add>, %13, %cst_6 [1, 2] : vector<1x8x1xf32> to vector<1xf32>
    %15 = vector.shape_cast %14 : vector<1xf32> to vector<1x1x1xf32>
    %16 = vector.extract %15[0, 0, 0] : f32 from vector<1x1x1xf32>
    %17 = vector.shape_cast %7 : vector<8x1xf32> to vector<1x8x1xf32>
    %cst_7 = arith.constant dense<0.000000e+00> : vector<1xf32>
    %18 = vector.multi_reduction <add>, %17, %cst_7 [1, 2] : vector<1x8x1xf32> to vector<1xf32>
    %19 = vector.shape_cast %18 : vector<1xf32> to vector<1x1x1xf32>
    %20 = vector.extract %19[0, 0, 0] : f32 from vector<1x1x1xf32>
    %21 = arith.addf %16, %20 : f32
    %cst_8 = arith.constant 3.200000e+01 : f32
    %22 = arith.mulf %cst_8, %21 : f32
    %23 = arith.mulf %12, %12 : vector<1x32xf32>
    %24 = vector.shape_cast %23 : vector<1x32xf32> to vector<1x1x32xf32>
    %cst_9 = arith.constant dense<0.000000e+00> : vector<1xf32>
    %25 = vector.multi_reduction <add>, %24, %cst_9 [1, 2] : vector<1x1x32xf32> to vector<1xf32>
    %26 = vector.shape_cast %25 : vector<1xf32> to vector<1x1x1xf32>
    %27 = vector.extract %26[0, 0, 0] : f32 from vector<1x1x1xf32>
    %cst_10 = arith.constant 2.000000e+00 : f32
    %28 = arith.mulf %cst_10, %27 : f32
    %29 = arith.subf %22, %28 : f32
    %cst_11 = arith.constant 2.560000e+02 : f32
    %30 = arith.divf %29, %cst_11 : f32
    %31 = tpu.transpose %4, [1, 0] : vector<8x1xf32> -> vector<1x8xf32>
    %32 = vector.broadcast %4 : vector<8x1xf32> to vector<8x8xf32>
    %33 = vector.broadcast %31 : vector<1x8xf32> to vector<8x8xf32>
    %34 = arith.addf %32, %33 : vector<8x8xf32>
    %cst_12 = arith.constant dense<0.000000e+00> : vector<8x8xf32>
    %35 = tpu.matmul %0, %0, %cst_12 {dimension_numbers = #tpu.dot_dimension_numbers<[1], [1], [0], [0], [0, 0, 1, 0], [], []>} : vector<8x32xf32>, vector<8x32xf32>, vector<8x8xf32> -> vector<8x8xf32>
    %cst_13 = arith.constant 2.000000e+00 : f32
    %36 = vector.broadcast %cst_13 : f32 to vector<8x8xf32>
    %37 = arith.mulf %36, %35 : vector<8x8xf32>
    %38 = arith.subf %34, %37 : vector<8x8xf32>
    %cst_14 = arith.constant 0.000000e+00 : f32
    %39 = vector.broadcast %cst_14 : f32 to vector<8x8xf32>
    %40 = arith.maximumf %38, %39 : vector<8x8xf32>
    %41 = tpu.transpose %7, [1, 0] : vector<8x1xf32> -> vector<1x8xf32>
    %42 = vector.broadcast %7 : vector<8x1xf32> to vector<8x8xf32>
    %43 = vector.broadcast %41 : vector<1x8xf32> to vector<8x8xf32>
    %44 = arith.addf %42, %43 : vector<8x8xf32>
    %cst_15 = arith.constant dense<0.000000e+00> : vector<8x8xf32>
    %45 = tpu.matmul %1, %1, %cst_15 {dimension_numbers = #tpu.dot_dimension_numbers<[1], [1], [0], [0], [0, 0, 1, 0], [], []>} : vector<8x32xf32>, vector<8x32xf32>, vector<8x8xf32> -> vector<8x8xf32>
    %cst_16 = arith.constant 2.000000e+00 : f32
    %46 = vector.broadcast %cst_16 : f32 to vector<8x8xf32>
    %47 = arith.mulf %46, %45 : vector<8x8xf32>
    %48 = arith.subf %44, %47 : vector<8x8xf32>
    %cst_17 = arith.constant 0.000000e+00 : f32
    %49 = vector.broadcast %cst_17 : f32 to vector<8x8xf32>
    %50 = arith.maximumf %48, %49 : vector<8x8xf32>
    %51 = tpu.transpose %7, [1, 0] : vector<8x1xf32> -> vector<1x8xf32>
    %52 = vector.broadcast %4 : vector<8x1xf32> to vector<8x8xf32>
    %53 = vector.broadcast %51 : vector<1x8xf32> to vector<8x8xf32>
    %54 = arith.addf %52, %53 : vector<8x8xf32>
    %cst_18 = arith.constant dense<0.000000e+00> : vector<8x8xf32>
    %55 = tpu.matmul %0, %1, %cst_18 {dimension_numbers = #tpu.dot_dimension_numbers<[1], [1], [0], [0], [0, 0, 1, 0], [], []>} : vector<8x32xf32>, vector<8x32xf32>, vector<8x8xf32> -> vector<8x8xf32>
    %cst_19 = arith.constant 2.000000e+00 : f32
    %56 = vector.broadcast %cst_19 : f32 to vector<8x8xf32>
    %57 = arith.mulf %56, %55 : vector<8x8xf32>
    %58 = arith.subf %54, %57 : vector<8x8xf32>
    %cst_20 = arith.constant 0.000000e+00 : f32
    %59 = vector.broadcast %cst_20 : f32 to vector<8x8xf32>
    %60 = arith.maximumf %58, %59 : vector<8x8xf32>
    %cst_21 = arith.constant 2.000000e+00 : f32
    %61 = arith.mulf %cst_21, %30 : f32
    %cst_22 = arith.constant 9.99999996E-13 : f32
    %62 = arith.maximumf %61, %cst_22 : f32
    %cst_23 = arith.constant -5.000000e-01 : f32
    %63 = arith.divf %cst_23, %62 : f32
    %64 = vector.broadcast %63 : f32 to vector<8x8xf32>
    %65 = arith.mulf %40, %64 : vector<8x8xf32>
    %66 = math.exp %65 : vector<8x8xf32>
    %67 = arith.mulf %66, %66 : vector<8x8xf32>
    %68 = arith.addf %66, %67 : vector<8x8xf32>
    %69 = arith.mulf %67, %67 : vector<8x8xf32>
    %70 = arith.addf %68, %69 : vector<8x8xf32>
    %71 = arith.mulf %69, %69 : vector<8x8xf32>
    %72 = arith.addf %70, %71 : vector<8x8xf32>
    %73 = arith.mulf %71, %71 : vector<8x8xf32>
    %74 = arith.addf %72, %73 : vector<8x8xf32>
    %cst_24 = arith.constant 2.000000e+00 : f32
    %75 = arith.mulf %cst_24, %30 : f32
    %cst_25 = arith.constant 9.99999996E-13 : f32
    %76 = arith.maximumf %75, %cst_25 : f32
    %cst_26 = arith.constant -5.000000e-01 : f32
    %77 = arith.divf %cst_26, %76 : f32
    %78 = vector.broadcast %77 : f32 to vector<8x8xf32>
    %79 = arith.mulf %50, %78 : vector<8x8xf32>
    %80 = math.exp %79 : vector<8x8xf32>
    %81 = arith.mulf %80, %80 : vector<8x8xf32>
    %82 = arith.addf %80, %81 : vector<8x8xf32>
    %83 = arith.mulf %81, %81 : vector<8x8xf32>
    %84 = arith.addf %82, %83 : vector<8x8xf32>
    %85 = arith.mulf %83, %83 : vector<8x8xf32>
    %86 = arith.addf %84, %85 : vector<8x8xf32>
    %87 = arith.mulf %85, %85 : vector<8x8xf32>
    %88 = arith.addf %86, %87 : vector<8x8xf32>
    %cst_27 = arith.constant 2.000000e+00 : f32
    %89 = arith.mulf %cst_27, %30 : f32
    %cst_28 = arith.constant 9.99999996E-13 : f32
    %90 = arith.maximumf %89, %cst_28 : f32
    %cst_29 = arith.constant -5.000000e-01 : f32
    %91 = arith.divf %cst_29, %90 : f32
    %92 = vector.broadcast %91 : f32 to vector<8x8xf32>
    %93 = arith.mulf %60, %92 : vector<8x8xf32>
    %94 = math.exp %93 : vector<8x8xf32>
    %95 = arith.mulf %94, %94 : vector<8x8xf32>
    %96 = arith.addf %94, %95 : vector<8x8xf32>
    %97 = arith.mulf %95, %95 : vector<8x8xf32>
    %98 = arith.addf %96, %97 : vector<8x8xf32>
    %99 = arith.mulf %97, %97 : vector<8x8xf32>
    %100 = arith.addf %98, %99 : vector<8x8xf32>
    %101 = arith.mulf %99, %99 : vector<8x8xf32>
    %102 = arith.addf %100, %101 : vector<8x8xf32>
    %103 = vector.shape_cast %74 : vector<8x8xf32> to vector<1x8x8xf32>
    %cst_30 = arith.constant dense<0.000000e+00> : vector<1xf32>
    %104 = vector.multi_reduction <add>, %103, %cst_30 [1, 2] : vector<1x8x8xf32> to vector<1xf32>
    %105 = vector.shape_cast %104 : vector<1xf32> to vector<1x1x1xf32>
    %106 = vector.extract %105[0, 0, 0] : f32 from vector<1x1x1xf32>
    %107 = vector.shape_cast %88 : vector<8x8xf32> to vector<1x8x8xf32>
    %cst_31 = arith.constant dense<0.000000e+00> : vector<1xf32>
    %108 = vector.multi_reduction <add>, %107, %cst_31 [1, 2] : vector<1x8x8xf32> to vector<1xf32>
    %109 = vector.shape_cast %108 : vector<1xf32> to vector<1x1x1xf32>
    %110 = vector.extract %109[0, 0, 0] : f32 from vector<1x1x1xf32>
    %111 = arith.addf %106, %110 : f32
    %cst_32 = arith.constant 8.000000e+01 : f32
    %112 = arith.subf %111, %cst_32 : f32
    %113 = vector.shape_cast %102 : vector<8x8xf32> to vector<1x8x8xf32>
    %cst_33 = arith.constant dense<0.000000e+00> : vector<1xf32>
    %114 = vector.multi_reduction <add>, %113, %cst_33 [1, 2] : vector<1x8x8xf32> to vector<1xf32>
    %115 = vector.shape_cast %114 : vector<1xf32> to vector<1x1x1xf32>
    %116 = vector.extract %115[0, 0, 0] : f32 from vector<1x1x1xf32>
    %cst_34 = arith.constant 2.000000e+00 : f32
    %117 = arith.mulf %cst_34, %116 : f32
    %cst_35 = arith.constant 5.600000e+01 : f32
    %118 = arith.divf %112, %cst_35 : f32
    %cst_36 = arith.constant 6.400000e+01 : f32
    %119 = arith.divf %117, %cst_36 : f32
    %120 = arith.subf %118, %119 : f32
    %cst_37 = arith.constant 0.285714298 : f32
    %121 = arith.addf %120, %cst_37 : f32
    %c0_38 = arith.constant 0 : index
    %c0_39 = arith.constant 0 : index
    %122 = memref.load %arg2[%c0_38, %c0_39] : memref<1x1xf32, #tpu.memory_space<smem>>
    memref.store %121, %arg2[%c0_38, %c0_39] : memref<1x1xf32, #tpu.memory_space<smem>>
    return
  }
}

</mosaic_0001>

<llo_original>
// kernel: mkmmd_loss.1
$region0: #{mkmmd_loss.1}
  #allocation0 [shape = 'u32[]', space=smem, size = 0x4, offset = 0x4, fixed_abs, tag = 'smem constant byte address 0x4 - core index']
  #allocation1 [shape = 'u32[144,128]{1,0:T(1,128)}', space=vmem, size = 0x12000, scoped, tag = 'internal scratch']
  %s0 = inlined_call_operand.hbm [shape: f32[8,32], index: 0, kind: input, shape index: {}]
  %s1 = inlined_call_operand.hbm [shape: f32[8,32], index: 1, kind: input, shape index: {}]
  %s2 = inlined_call_operand.hbm [shape: f32[1,1], index: 2, kind: output, shape index: {}]
  %s3 = sld [smem:[#allocation0]]
  $region26: #{mkmmd_loss.1} parent=0
    _
  %s5 = ssub.s32 1, %s3
  %s6 = scalar_select 0, %s5, %s3
  $region1: #{mkmmd_loss.1} parent=0
    #allocation2 [shape = 'u8[4096]{0}', space=vmem, size = 0x1000, scoped, tag = 'input window, operand 0, single buffered']
    #allocation3 [shape = 's32[1]{0}', space=sflag, size = 0x4, scoped, tag = 'scoped memory for mkmmd_loss.1']
    #allocation4 [shape = 's32[1]{0}', space=sflag, size = 0x4, scoped, tag = 'scoped memory for mkmmd_loss.1']
    #allocation5 [shape = 'u8[4096]{0}', space=vmem, size = 0x1000, scoped, tag = 'input window, operand 1, single buffered']
    #allocation6 [shape = 's32[1]{0}', space=sflag, size = 0x4, scoped, tag = 'scoped memory for mkmmd_loss.1']
    #allocation7 [shape = 'u8[512]{0}', space=smem, size = 0x200, scoped, tag = 'output window, operand 0, single buffered']
    %7 = vsyncpa [#allocation3], 0
    %8 = vsyncpa [#allocation6], 0
    %9 = vsyncpa [#allocation4], 0
    // Predicated region
    $region2: #{mkmmd_loss.1} parent=1 // pred_check
      _
    $region3: #{mkmmd_loss.1} parent=1 // pred_check_branch
      %11 = sbr.rel (0) target = $region5
    $region4: #{mkmmd_loss.1} parent=1 // pred_region
      %s13 = ssub.s32 128, 128
      %14 = vsyncadd [#allocation3], %s13
      %s16 = sshll.u32 [#allocation2], 4
      %s17 = int_to_ptr.vmem [resolvable:$true] %s16
      %19 = dma.hbm_to_vmem [thread:$0]  %s0, 128, %s17, [#allocation3]
    $region5: #{mkmmd_loss.1} parent=1 // pred_fallthru
      _
    // Predicated region
    $region6: #{mkmmd_loss.1} parent=1 // pred_check
      _
    $region7: #{mkmmd_loss.1} parent=1 // pred_check_branch
      %21 = sbr.rel (0) target = $region9
    $region8: #{mkmmd_loss.1} parent=1 // pred_region
      %s23 = ssub.s32 128, 128
      %24 = vsyncadd [#allocation6], %s23
      %s26 = sshll.u32 [#allocation5], 4
      %s27 = int_to_ptr.vmem [resolvable:$true] %s26
      %29 = dma.hbm_to_vmem [thread:$0]  %s1, 128, %s27, [#allocation6]
    $region9: #{mkmmd_loss.1} parent=1 // pred_fallthru
      _
    // Predicated region
    $region10: #{mkmmd_loss.1} parent=1 // pred_check
      _
    $region11: #{mkmmd_loss.1} parent=1 // pred_check_branch
      %31 = sbr.rel (0) target = $region13
    $region12: #{mkmmd_loss.1} parent=1 // pred_region
      %32 = dma.done [#allocation3], 128
    $region13: #{mkmmd_loss.1} parent=1 // pred_fallthru
      _
    // Predicated region
    $region14: #{mkmmd_loss.1} parent=1 // pred_check
      _
    $region15: #{mkmmd_loss.1} parent=1 // pred_check_branch
      %34 = sbr.rel (0) target = $region17
    $region16: #{mkmmd_loss.1} parent=1 // pred_region
      %35 = dma.done [#allocation6], 128
    $region17: #{mkmmd_loss.1} parent=1 // pred_fallthru
      _
    %v36 = vld [vmem:[#allocation2] sm:$0xff]
    %v37 = vld [vmem:[#allocation5] sm:$0xff]
    %v38 = vmul.f32 %v36, %v36
    %vm39 = vcmask 261120
    %v40 = vsel %vm39, %v38, 0.0
    %41 = vadd.xlane.f32.xlu0 %v40
    %v42 = vpop.xlane.xlu0 %41
    %v43 = vmul.f32 %v37, %v37
    %v44 = vsel %vm39, %v43, 0.0
    %45 = vadd.xlane.f32.xlu0 %v44
    %v46 = vpop.xlane.xlu0 %45
    %v47 = vsel %vm39, %v36, 0.0
    %v48 = vrot.slane %v47, 4
    %v49 = vadd.f32 %v47, %v48
    %v50 = vrot.slane %v49, 2
    %v51 = vadd.f32 %v49, %v50
    %v52 = vrot.slane %v51, 1
    %v53 = vadd.f32 %v51, %v52
    %v54 = vsel %vm39, %v37, 0.0
    %v55 = vrot.slane %v54, 4
    %v56 = vadd.f32 %v54, %v55
    %v57 = vrot.slane %v56, 2
    %v58 = vadd.f32 %v56, %v57
    %v59 = vrot.slane %v58, 1
    %v60 = vadd.f32 %v58, %v59
    %v61 = vadd.f32 %v53, %v60
    %vm62 = vcmask 7168
    %v63 = vsel %vm62, %v42, 0.0
    %64 = vadd.xlane.f32.xlu0 %v63
    %v65 = vpop.xlane.xlu0 %64
    %v66 = vrot.slane %v65, 4
    %v67 = vadd.f32 %v65, %v66
    %v68 = vrot.slane %v67, 2
    %v69 = vadd.f32 %v67, %v68
    %v70 = vrot.slane %v69, 1
    %v71 = vadd.f32 %v69, %v70
    %s72 = vtos %v71
    %v73 = vsel %vm62, %v46, 0.0
    %74 = vadd.xlane.f32.xlu0 %v73
    %v75 = vpop.xlane.xlu0 %74
    %v76 = vrot.slane %v75, 4
    %v77 = vadd.f32 %v75, %v76
    %v78 = vrot.slane %v77, 2
    %v79 = vadd.f32 %v77, %v78
    %v80 = vrot.slane %v79, 1
    %v81 = vadd.f32 %v79, %v80
    %s82 = vtos %v81
    %s83 = sadd.f32 %s72, %s82
    %s84 = smul.f32 %s83, 32.0
    %v85 = vmul.f32 %v61, %v61
    %vm86 = vcmask 253952
    %v87 = vsel %vm86, %v85, 0.0
    %88 = vadd.xlane.f32.xlu0 %v87
    %v89 = vpop.xlane.xlu0 %88
    %v90 = vrot.slane %v89, 4
    %v91 = vadd.f32 %v89, %v90
    %v92 = vrot.slane %v91, 2
    %v93 = vadd.f32 %v91, %v92
    %v94 = vrot.slane %v93, 1
    %v95 = vadd.f32 %v93, %v94
    %s96 = vtos %v95
    %s97 = smul.f32 %s96, 2.0
    %s98 = ssub.f32 %s84, %s97
    %v99 = vrcp.pop 256.0
    %s100 = vtos %v99
    %s101 = smul.f32 %s98, %s100
    %102 = vxpose.xlu0.b32.start [1/16] %v42, 128
    %103 = vxpose.xlu0.b32.cont [2/16] 0.0, 128
    %104 = vxpose.xlu0.b32.cont [3/16] 0.0, 128
    %105 = vxpose.xlu0.b32.cont [4/16] 0.0, 128
    %106 = vxpose.xlu0.b32.cont [5/16] 0.0, 128
    %107 = vxpose.xlu0.b32.cont [6/16] 0.0, 128
    %108 = vxpose.xlu0.b32.cont [7/16] 0.0, 128
    %109 = vxpose.xlu0.b32.cont [8/16] 0.0, 128
    %110 = vxpose.xlu0.b32.cont [9/16] 0.0, 128
    %111 = vxpose.xlu0.b32.cont [10/16] 0.0, 128
    %112 = vxpose.xlu0.b32.cont [11/16] 0.0, 128
    %113 = vxpose.xlu0.b32.cont [12/16] 0.0, 128
    %114 = vxpose.xlu0.b32.cont [13/16] 0.0, 128
    %115 = vxpose.xlu0.b32.cont [14/16] 0.0, 128
    %116 = vxpose.xlu0.b32.cont [15/16] 0.0, 128
    %117 = vxpose.xlu0.b32.end [16/16] 0.0, 128
    %v118 = vpop.trf.xlu0
    %v119 = vpop.trf.xlu0
    %v120 = vpop.trf.xlu0
    %v121 = vpop.trf.xlu0
    %v122 = vpop.trf.xlu0
    %v123 = vpop.trf.xlu0
    %v124 = vpop.trf.xlu0
    %v125 = vpop.trf.xlu0
    %v126 = vpop.trf.xlu0
    %v127 = vpop.trf.xlu0
    %v128 = vpop.trf.xlu0
    %v129 = vpop.trf.xlu0
    %v130 = vpop.trf.xlu0
    %v131 = vpop.trf.xlu0
    %v132 = vpop.trf.xlu0
    %v133 = vpop.trf.xlu0
    %v134 = vlaneseq
    %v135 = vshrl.u32 %v134, 7
    %v136 = vsub.s32 0, %v135
    %v137 = vrot.slane %v118, %v136
    %v138 = vadd.f32 %v42, %v137
    %v140 = vsel %vm39, %v36, 0
    %142 = vmatprep.subr.mxu0 0.0
    %143 = vmatpush1.xpose.msra.mxu0 0.0
    %144 = vmatprep.subr.mxu0 0.0
    %145 = vmatpush1.xpose.msra.mxu0 0.0
    %146 = vmatprep.subr.mxu0 0.0
    %147 = vmatpush1.xpose.msra.mxu0 0.0
    %148 = vmatprep.subr.mxu0 0.0
    %149 = vmatpush1.xpose.msra.mxu0 0.0
    %150 = vmatprep.subr.mxu0 0.0
    %151 = vmatpush1.xpose.msra.mxu0 0.0
    %152 = vmatprep.subr.mxu0 0.0
    %153 = vmatpush1.xpose.msra.mxu0 0.0
    %154 = vmatprep.subr.mxu0 0.0
    %155 = vmatpush1.xpose.msra.mxu0 0.0
    %156 = vmatprep.subr.mxu0 0.0
    %157 = vmatpush1.xpose.msra.mxu0 0.0
    %158 = vmatprep.subr.mxu0 0.0
    %159 = vmatpush1.xpose.msra.mxu0 0.0
    %160 = vmatprep.subr.mxu0 0.0
    %161 = vmatpush1.xpose.msra.mxu0 0.0
    %162 = vmatprep.subr.mxu0 0.0
    %163 = vmatpush1.xpose.msra.mxu0 0.0
    %164 = vmatprep.subr.mxu0 0.0
    %165 = vmatpush1.xpose.msra.mxu0 0.0
    %166 = vmatprep.subr.mxu0 0.0
    %167 = vmatpush1.xpose.msra.mxu0 0.0
    %168 = vmatprep.subr.mxu0 0.0
    %169 = vmatpush1.xpose.msra.mxu0 0.0
    %170 = vmatprep.subr.mxu0 0.0
    %171 = vmatpush1.xpose.msra.mxu0 0.0
    %172 = vmatprep.subr.mxu0 0.0
    %173 = vmatpush1.xpose.msra.mxu0 %v140
    %174 = vmatprep.subr.mxu0 0.0
    %175 = vmatpush2.xpose.msra.mxu0 0.0
    %176 = vmatprep.subr.mxu0 0.0
    %177 = vmatpush2.xpose.msra.mxu0 0.0
    %178 = vmatprep.subr.mxu0 0.0
    %179 = vmatpush2.xpose.msra.mxu0 0.0
    %180 = vmatprep.subr.mxu0 0.0
    %181 = vmatpush2.xpose.msra.mxu0 0.0
    %182 = vmatprep.subr.mxu0 0.0
    %183 = vmatpush2.xpose.msra.mxu0 0.0
    %184 = vmatprep.subr.mxu0 0.0
    %185 = vmatpush2.xpose.msra.mxu0 0.0
    %186 = vmatprep.subr.mxu0 0.0
    %187 = vmatpush2.xpose.msra.mxu0 0.0
    %188 = vmatprep.subr.mxu0 0.0
    %189 = vmatpush2.xpose.msra.mxu0 0.0
    %190 = vmatprep.subr.mxu0 0.0
    %191 = vmatpush2.xpose.msra.mxu0 0.0
    %192 = vmatprep.subr.mxu0 0.0
    %193 = vmatpush2.xpose.msra.mxu0 0.0
    %194 = vmatprep.subr.mxu0 0.0
    %195 = vmatpush2.xpose.msra.mxu0 0.0
    %196 = vmatprep.subr.mxu0 0.0
    %197 = vmatpush2.xpose.msra.mxu0 0.0
    %198 = vmatprep.subr.mxu0 0.0
    %199 = vmatpush2.xpose.msra.mxu0 0.0
    %200 = vmatprep.subr.mxu0 0.0
    %201 = vmatpush2.xpose.msra.mxu0 0.0
    %202 = vmatprep.subr.mxu0 0.0
    %203 = vmatpush2.xpose.msra.mxu0 0.0
    %204 = vmatprep.subr.mxu0 0.0
    %205 = vmatpush2.xpose.msra.mxu0 0.0
    %206 = vmatprep.mubr.f32.mxu0 0.0
    %207 = vmatmul.mubr.f32.gmra.mxu0 %v140
    %v208 = vpop.f32.mrf.mxu0
    %v209 = vadd.f32 0.0, %v208
    %v210 = vpop.f32.mrf.mxu0
    %211 = vdwg.mxu0
    %v212 = vmul.f32 %v209, 2.0
    %v213 = vsub.f32 %v138, %v212
    %v214 = vmax.f32 %v213, 0.0
    %215 = vxpose.xlu0.b32.start [1/16] %v46, 128
    %216 = vxpose.xlu0.b32.cont [2/16] 0.0, 128
    %217 = vxpose.xlu0.b32.cont [3/16] 0.0, 128
    %218 = vxpose.xlu0.b32.cont [4/16] 0.0, 128
    %219 = vxpose.xlu0.b32.cont [5/16] 0.0, 128
    %220 = vxpose.xlu0.b32.cont [6/16] 0.0, 128
    %221 = vxpose.xlu0.b32.cont [7/16] 0.0, 128
    %222 = vxpose.xlu0.b32.cont [8/16] 0.0, 128
    %223 = vxpose.xlu0.b32.cont [9/16] 0.0, 128
    %224 = vxpose.xlu0.b32.cont [10/16] 0.0, 128
    %225 = vxpose.xlu0.b32.cont [11/16] 0.0, 128
    %226 = vxpose.xlu0.b32.cont [12/16] 0.0, 128
    %227 = vxpose.xlu0.b32.cont [13/16] 0.0, 128
    %228 = vxpose.xlu0.b32.cont [14/16] 0.0, 128
    %229 = vxpose.xlu0.b32.cont [15/16] 0.0, 128
    %230 = vxpose.xlu0.b32.end [16/16] 0.0, 128
    %v231 = vpop.trf.xlu0
    %v232 = vpop.trf.xlu0
    %v233 = vpop.trf.xlu0
    %v234 = vpop.trf.xlu0
    %v235 = vpop.trf.xlu0
    %v236 = vpop.trf.xlu0
    %v237 = vpop.trf.xlu0
    %v238 = vpop.trf.xlu0
    %v239 = vpop.trf.xlu0
    %v240 = vpop.trf.xlu0
    %v241 = vpop.trf.xlu0
    %v242 = vpop.trf.xlu0
    %v243 = vpop.trf.xlu0
    %v244 = vpop.trf.xlu0
    %v245 = vpop.trf.xlu0
    %v246 = vpop.trf.xlu0
    %v247 = vlaneseq
    %v248 = vshrl.u32 %v247, 7
    %v249 = vsub.s32 0, %v248
    %v250 = vrot.slane %v231, %v249
    %v251 = vadd.f32 %v46, %v250
    %v253 = vsel %vm39, %v37, 0
    %255 = vmatprep.subr.mxu0 0.0
    %256 = vmatpush1.xpose.msra.mxu0 0.0
    %257 = vmatprep.subr.mxu0 0.0
    %258 = vmatpush1.xpose.msra.mxu0 0.0
    %259 = vmatprep.subr.mxu0 0.0
    %260 = vmatpush1.xpose.msra.mxu0 0.0
    %261 = vmatprep.subr.mxu0 0.0
    %262 = vmatpush1.xpose.msra.mxu0 0.0
    %263 = vmatprep.subr.mxu0 0.0
    %264 = vmatpush1.xpose.msra.mxu0 0.0
    %265 = vmatprep.subr.mxu0 0.0
    %266 = vmatpush1.xpose.msra.mxu0 0.0
    %267 = vmatprep.subr.mxu0 0.0
    %268 = vmatpush1.xpose.msra.mxu0 0.0
    %269 = vmatprep.subr.mxu0 0.0
    %270 = vmatpush1.xpose.msra.mxu0 0.0
    %271 = vmatprep.subr.mxu0 0.0
    %272 = vmatpush1.xpose.msra.mxu0 0.0
    %273 = vmatprep.subr.mxu0 0.0
    %274 = vmatpush1.xpose.msra.mxu0 0.0
    %275 = vmatprep.subr.mxu0 0.0
    %276 = vmatpush1.xpose.msra.mxu0 0.0
    %277 = vmatprep.subr.mxu0 0.0
    %278 = vmatpush1.xpose.msra.mxu0 0.0
    %279 = vmatprep.subr.mxu0 0.0
    %280 = vmatpush1.xpose.msra.mxu0 0.0
    %281 = vmatprep.subr.mxu0 0.0
    %282 = vmatpush1.xpose.msra.mxu0 0.0
    %283 = vmatprep.subr.mxu0 0.0
    %284 = vmatpush1.xpose.msra.mxu0 0.0
    %285 = vmatprep.subr.mxu0 0.0
    %286 = vmatpush1.xpose.msra.mxu0 %v253
    %287 = vmatprep.subr.mxu0 0.0
    %288 = vmatpush2.xpose.msra.mxu0 0.0
    %289 = vmatprep.subr.mxu0 0.0
    %290 = vmatpush2.xpose.msra.mxu0 0.0
    %291 = vmatprep.subr.mxu0 0.0
    %292 = vmatpush2.xpose.msra.mxu0 0.0
    %293 = vmatprep.subr.mxu0 0.0
    %294 = vmatpush2.xpose.msra.mxu0 0.0
    %295 = vmatprep.subr.mxu0 0.0
    %296 = vmatpush2.xpose.msra.mxu0 0.0
    %297 = vmatprep.subr.mxu0 0.0
    %298 = vmatpush2.xpose.msra.mxu0 0.0
    %299 = vmatprep.subr.mxu0 0.0
    %300 = vmatpush2.xpose.msra.mxu0 0.0
    %301 = vmatprep.subr.mxu0 0.0
    %302 = vmatpush2.xpose.msra.mxu0 0.0
    %303 = vmatprep.subr.mxu0 0.0
    %304 = vmatpush2.xpose.msra.mxu0 0.0
    %305 = vmatprep.subr.mxu0 0.0
    %306 = vmatpush2.xpose.msra.mxu0 0.0
    %307 = vmatprep.subr.mxu0 0.0
    %308 = vmatpush2.xpose.msra.mxu0 0.0
    %309 = vmatprep.subr.mxu0 0.0
    %310 = vmatpush2.xpose.msra.mxu0 0.0
    %311 = vmatprep.subr.mxu0 0.0
    %312 = vmatpush2.xpose.msra.mxu0 0.0
    %313 = vmatprep.subr.mxu0 0.0
    %314 = vmatpush2.xpose.msra.mxu0 0.0
    %315 = vmatprep.subr.mxu0 0.0
    %316 = vmatpush2.xpose.msra.mxu0 0.0
    %317 = vmatprep.subr.mxu0 0.0
    %318 = vmatpush2.xpose.msra.mxu0 0.0
    %319 = vmatprep.mubr.f32.mxu0 0.0
    %320 = vmatmul.mubr.f32.gmra.mxu0 %v253
    %v321 = vpop.f32.mrf.mxu0
    %v322 = vadd.f32 0.0, %v321
    %v323 = vpop.f32.mrf.mxu0
    %324 = vdwg.mxu0
    %v325 = vmul.f32 %v322, 2.0
    %v326 = vsub.f32 %v251, %v325
    %v327 = vmax.f32 %v326, 0.0
    %v328 = vadd.f32 %v42, %v250
    %329 = vmatprep.subr.mxu0 0.0
    %330 = vmatpush1.xpose.msra.mxu0 0.0
    %331 = vmatprep.subr.mxu0 0.0
    %332 = vmatpush1.xpose.msra.mxu0 0.0
    %333 = vmatprep.subr.mxu0 0.0
    %334 = vmatpush1.xpose.msra.mxu0 0.0
    %335 = vmatprep.subr.mxu0 0.0
    %336 = vmatpush1.xpose.msra.mxu0 0.0
    %337 = vmatprep.subr.mxu0 0.0
    %338 = vmatpush1.xpose.msra.mxu0 0.0
    %339 = vmatprep.subr.mxu0 0.0
    %340 = vmatpush1.xpose.msra.mxu0 0.0
    %341 = vmatprep.subr.mxu0 0.0
    %342 = vmatpush1.xpose.msra.mxu0 0.0
    %343 = vmatprep.subr.mxu0 0.0
    %344 = vmatpush1.xpose.msra.mxu0 0.0
    %345 = vmatprep.subr.mxu0 0.0
    %346 = vmatpush1.xpose.msra.mxu0 0.0
    %347 = vmatprep.subr.mxu0 0.0
    %348 = vmatpush1.xpose.msra.mxu0 0.0
    %349 = vmatprep.subr.mxu0 0.0
    %350 = vmatpush1.xpose.msra.mxu0 0.0
    %351 = vmatprep.subr.mxu0 0.0
    %352 = vmatpush1.xpose.msra.mxu0 0.0
    %353 = vmatprep.subr.mxu0 0.0
    %354 = vmatpush1.xpose.msra.mxu0 0.0
    %355 = vmatprep.subr.mxu0 0.0
    %356 = vmatpush1.xpose.msra.mxu0 0.0
    %357 = vmatprep.subr.mxu0 0.0
    %358 = vmatpush1.xpose.msra.mxu0 0.0
    %359 = vmatprep.subr.mxu0 0.0
    %360 = vmatpush1.xpose.msra.mxu0 %v253
    %361 = vmatprep.subr.mxu0 0.0
    %362 = vmatpush2.xpose.msra.mxu0 0.0
    %363 = vmatprep.subr.mxu0 0.0
    %364 = vmatpush2.xpose.msra.mxu0 0.0
    %365 = vmatprep.subr.mxu0 0.0
    %366 = vmatpush2.xpose.msra.mxu0 0.0
    %367 = vmatprep.subr.mxu0 0.0
    %368 = vmatpush2.xpose.msra.mxu0 0.0
    %369 = vmatprep.subr.mxu0 0.0
    %370 = vmatpush2.xpose.msra.mxu0 0.0
    %371 = vmatprep.subr.mxu0 0.0
    %372 = vmatpush2.xpose.msra.mxu0 0.0
    %373 = vmatprep.subr.mxu0 0.0
    %374 = vmatpush2.xpose.msra.mxu0 0.0
    %375 = vmatprep.subr.mxu0 0.0
    %376 = vmatpush2.xpose.msra.mxu0 0.0
    %377 = vmatprep.subr.mxu0 0.0
    %378 = vmatpush2.xpose.msra.mxu0 0.0
    %379 = vmatprep.subr.mxu0 0.0
    %380 = vmatpush2.xpose.msra.mxu0 0.0
    %381 = vmatprep.subr.mxu0 0.0
    %382 = vmatpush2.xpose.msra.mxu0 0.0
    %383 = vmatprep.subr.mxu0 0.0
    %384 = vmatpush2.xpose.msra.mxu0 0.0
    %385 = vmatprep.subr.mxu0 0.0
    %386 = vmatpush2.xpose.msra.mxu0 0.0
    %387 = vmatprep.subr.mxu0 0.0
    %388 = vmatpush2.xpose.msra.mxu0 0.0
    %389 = vmatprep.subr.mxu0 0.0
    %390 = vmatpush2.xpose.msra.mxu0 0.0
    %391 = vmatprep.subr.mxu0 0.0
    %392 = vmatpush2.xpose.msra.mxu0 0.0
    %393 = vmatprep.mubr.f32.mxu0 0.0
    %394 = vmatmul.mubr.f32.gmra.mxu0 %v140
    %v395 = vpop.f32.mrf.mxu0
    %v396 = vadd.f32 0.0, %v395
    %v397 = vpop.f32.mrf.mxu0
    %398 = vdwg.mxu0
    %v399 = vmul.f32 %v396, 2.0
    %v400 = vsub.f32 %v328, %v399
    %v401 = vmax.f32 %v400, 0.0
    %s402 = smul.f32 %s101, 2.0
    %s403 = smax.f32 %s402, 1e-12
    %v404 = vstv %s403
    %v405 = vrcp.pop %v404
    %s406 = vtos %v405
    %s407 = smul.f32 -0.5, %s406
    %v408 = vstv %s407
    %v409 = vmul.f32 %v214, %v408
    %v410 = vmul.f32 %v409, 1.442695
    %v411 = vpow.pop %v410
    %v412 = vmul.f32 %v411, %v411
    %v413 = vadd.f32 %v411, %v412
    %v414 = vmul.f32 %v412, %v412
    %v415 = vadd.f32 %v413, %v414
    %v416 = vmul.f32 %v414, %v414
    %v417 = vadd.f32 %v415, %v416
    %v418 = vmul.f32 %v416, %v416
    %v419 = vadd.f32 %v417, %v418
    %v420 = vmul.f32 %v327, %v408
    %v421 = vmul.f32 %v420, 1.442695
    %v422 = vpow.pop %v421
    %v423 = vmul.f32 %v422, %v422
    %v424 = vadd.f32 %v422, %v423
    %v425 = vmul.f32 %v423, %v423
    %v426 = vadd.f32 %v424, %v425
    %v427 = vmul.f32 %v425, %v425
    %v428 = vadd.f32 %v426, %v427
    %v429 = vmul.f32 %v427, %v427
    %v430 = vadd.f32 %v428, %v429
    %v431 = vmul.f32 %v401, %v408
    %v432 = vmul.f32 %v431, 1.442695
    %v433 = vpow.pop %v432
    %v434 = vmul.f32 %v433, %v433
    %v435 = vadd.f32 %v433, %v434
    %v436 = vmul.f32 %v434, %v434
    %v437 = vadd.f32 %v435, %v436
    %v438 = vmul.f32 %v436, %v436
    %v439 = vadd.f32 %v437, %v438
    %v440 = vmul.f32 %v438, %v438
    %v441 = vadd.f32 %v439, %v440
    %vm442 = vcmask 64512
    %v443 = vsel %vm442, %v419, 0.0
    %444 = vadd.xlane.f32.xlu0 %v443
    %v445 = vpop.xlane.xlu0 %444
    %v446 = vrot.slane %v445, 4
    %v447 = vadd.f32 %v445, %v446
    %v448 = vrot.slane %v447, 2
    %v449 = vadd.f32 %v447, %v448
    %v450 = vrot.slane %v449, 1
    %v451 = vadd.f32 %v449, %v450
    %s452 = vtos %v451
    %v453 = vsel %vm442, %v430, 0.0
    %454 = vadd.xlane.f32.xlu0 %v453
    %v455 = vpop.xlane.xlu0 %454
    %v456 = vrot.slane %v455, 4
    %v457 = vadd.f32 %v455, %v456
    %v458 = vrot.slane %v457, 2
    %v459 = vadd.f32 %v457, %v458
    %v460 = vrot.slane %v459, 1
    %v461 = vadd.f32 %v459, %v460
    %s462 = vtos %v461
    %s463 = sadd.f32 %s452, %s462
    %s464 = ssub.f32 %s463, 80.0
    %v465 = vsel %vm442, %v441, 0.0
    %466 = vadd.xlane.f32.xlu0 %v465
    %v467 = vpop.xlane.xlu0 %466
    %v468 = vrot.slane %v467, 4
    %v469 = vadd.f32 %v467, %v468
    %v470 = vrot.slane %v469, 2
    %v471 = vadd.f32 %v469, %v470
    %v472 = vrot.slane %v471, 1
    %v473 = vadd.f32 %v471, %v472
    %s474 = vtos %v473
    %s475 = smul.f32 %s474, 2.0
    %v476 = vrcp.pop 56.0
    %s477 = vtos %v476
    %s478 = smul.f32 %s464, %s477
    %v479 = vrcp.pop 64.0
    %s480 = vtos %v479
    %s481 = smul.f32 %s475, %s480
    %s482 = ssub.f32 %s478, %s481
    %s483 = sadd.f32 %s482, 0.2857143
    %s484 = scalar_lea.smem [#allocation7], 0
    %485 = sst [smem:[%s484]] %s483
    // Predicated region
    $region18: #{mkmmd_loss.1} parent=1 // pred_check
      _
    $region19: #{mkmmd_loss.1} parent=1 // pred_check_branch
      %487 = sbr.rel (0) target = $region21
    $region20: #{mkmmd_loss.1} parent=1 // pred_region
      %s489 = ssub.s32 16, 16
      %490 = vsyncadd [#allocation4], %s489
      %493 = dma.smem_to_hbm [#allocation7], 16, %s2, [#allocation4]
    $region21: #{mkmmd_loss.1} parent=1 // pred_fallthru
      _
    // Predicated region
    $region22: #{mkmmd_loss.1} parent=1 // pred_check
      _
    $region23: #{mkmmd_loss.1} parent=1 // pred_check_branch
      %495 = sbr.rel (0) target = $region25
    $region24: #{mkmmd_loss.1} parent=1 // pred_region
      %496 = dma.done [#allocation4], 16
    $region25: #{mkmmd_loss.1} parent=1 // pred_fallthru
      _
    %497 = sfence
    %498 = vsyncpa [#allocation3], 1
    %499 = vsyncpa [#allocation6], 1
    %500 = vsyncpa [#allocation4], 1

</llo_original>
